<compile_context>
chip_gen: v7x
topology: tpu7x:2x2x1
jax: 0.10.0
libtpu: 0.0.40
codegen_flags: <defaults>
</compile_context>

<pallas_src>
import functools

import numpy as np
import jax
import jax.numpy as jnp
from jax.experimental import pallas as pl
from jax.experimental.pallas import tpu as pltpu


# ---------------------------------------------------------------------------
# Kernels
# ---------------------------------------------------------------------------


def _avgpool_flat_kernel(x_ref, p_ref, o_ref, *, scale):
    """Small-spatial path: one lane-dense matmul per grid step.

    x_ref: (TB, G*H*W)       G packed images per row (lane-dense)
    p_ref: (G*H*W, G*Ho*Wo)  block-diagonal 0/1 pooling indicator (resident)
    o_ref: (TB, G*Ho*Wo)     pooled rows (lane-dense)
    """
    acc = jnp.dot(x_ref[...], p_ref[...], preferred_element_type=jnp.float32)
    o_ref[...] = (acc * scale).astype(o_ref.dtype)


def _avgpool_factored_kernel(x_ref, at_ref, b_ref, o_ref, *, scale):
    """Large-spatial path: out = A @ x @ B per image, as two flat 2-D matmuls.

    x_ref: (TB, H, W); at_ref: (H, Ho) f32 (= A^T); b_ref: (W, Wo);
    o_ref: (TB, Ho, Wo).

    No broadcast_to / batched einsum: the W pool is one large-M
    (TB*H, W) @ (W, Wo) matmul and the H pool is one large-M
    (TB*Wo, H) @ (H, Ho) matmul; the two minor-dim swaps run on the XLU.
    """
    tb, h, w = x_ref.shape
    ho = at_ref.shape[1]
    wo = b_ref.shape[1]
    # W pooling, f32 accumulation.
    xw = jnp.dot(x_ref[...].reshape(tb * h, w), b_ref[...],
                 preferred_element_type=jnp.float32)            # (TB*H, Wo)
    # Bring H to the lane axis so the H pool is also one flat matmul.
    xwt = jnp.swapaxes(xw.reshape(tb, h, wo), 1, 2)             # (TB, Wo, H)
    hp = jnp.dot(xwt.reshape(tb * wo, h), at_ref[...],
                 preferred_element_type=jnp.float32)            # (TB*Wo, Ho)
    out = jnp.swapaxes(hp.reshape(tb, wo, ho), 1, 2)            # (TB, Ho, Wo)
    o_ref[...] = (out * scale).astype(o_ref.dtype)


# ---------------------------------------------------------------------------
# Helpers (host-side, compile-time)
# ---------------------------------------------------------------------------


def _pool_indicators_np(h, w, pool_size, stride):
    """0/1 indicator matrices A (Ho, H) and B (W, Wo) as numpy constants."""
    ph = pw = pool_size
    ho = (h - ph) // stride + 1
    wo = (w - pw) // stride + 1
    rows = np.arange(h)[None, :]
    oh = np.arange(ho)[:, None]
    a_ind = (rows >= oh * stride) & (rows < oh * stride + ph)          # (Ho, H)
    cols = np.arange(w)[:, None]
    ow = np.arange(wo)[None, :]
    b_ind = (cols >= ow * stride) & (cols < ow * stride + pw)          # (W, Wo)
    return a_ind, b_ind, ho, wo


def _chip_params():
    """(VMEM bytes, f32 MXU-vs-HBM crossover in flops/byte with ~0.7 margin)."""
    kind = ""
    try:
        kind = jax.devices()[0].device_kind.lower()
    except Exception:
        pass
    vmem = None
    try:
        vmem = int(pltpu.get_tpu_info().vmem_capacity_bytes)
    except Exception:
        pass
    if "v5 lite" in kind or "v5e" in kind or "v5lite" in kind:
        return (vmem or (128 << 20)), 40.0     # ~49 TF/s f32 / 0.82 TB/s
    if "v6" in kind:
        return (vmem or (128 << 20)), 120.0    # ~230 TF/s f32 / 1.35 TB/s
    if "7x" in kind or "v7" in kind:
        return (vmem or (64 << 20)), 55.0      # ~250 TF/s f32 / 3.2 TB/s
    if "v4" in kind or "v5" in kind:           # v4 / v5p
        return (vmem or (128 << 20)), 80.0
    return (vmem or (64 << 20)), 40.0          # unknown: conservative


def _choose_block_rows(rows, row_bytes, budget_bytes, align):
    """Rows per grid step: VMEM-budgeted, dtype-sublane-aligned, and arranged
    so the grid has >=2 (preferably an even number of) steps when there is
    enough work (v7x megacore).  Never falls back to the whole array when one
    aligned block already exceeds the budget — clamps to `align` instead."""
    if rows <= align:
        return int(rows)                       # block spans the full row extent
    tb = budget_bytes // max(1, row_bytes)
    tb = max(1, min(int(tb), rows))
    if rows >= 2 * align:                      # keep >= 2 grid steps
        tb = min(tb, -(-rows // 2))
    tb = max(align, (tb // align) * align)
    steps = -(-rows // tb)
    if steps > 1 and steps % 2:                # prefer an even step count (v7x)
        alt = -(-rows // (steps + 1))
        alt = max(align, (-(-alt // align)) * align)
        if -(-rows // alt) % 2 == 0:
            tb = alt
    return int(min(tb, rows))


def _mosaic_params(needed_bytes, vmem_cap):
    # TODO(synk): for images too large for even an `align`-row block, add a
    # second grid axis over the spatial dims instead of growing the limit.
    limit = int(min(max(needed_bytes + (4 << 20), 32 << 20), int(vmem_cap * 0.85)))
    return pltpu.CompilerParams(
        dimension_semantics=("parallel",), vmem_limit_bytes=limit)


# ---------------------------------------------------------------------------
# Wrapper
# ---------------------------------------------------------------------------


@functools.partial(jax.jit, static_argnames=("pool_size", "stride", "_force_path"))
def avg_pool(x, pool_size, stride, _force_path=None):
    """x: (N, C, H, W) -> (N, C, Ho, Wo); matches nn.AvgPool2d(pool_size, stride)."""
    n, c, h, w = x.shape
    nc = n * c
    itemsize = jnp.dtype(x.dtype).itemsize
    align = max(8, 32 // itemsize)                 # 8 f32 / 16 bf16 / 32 int8
    a_ind, b_ind, ho, wo = _pool_indicators_np(h, w, pool_size, stride)
    hw, howo = h * w, ho * wo
    scale = 1.0 / float(pool_size * pool_size)

    vmem_cap, xover_f32 = _chip_params()
    xover = xover_f32 * (4.0 / itemsize)           # narrower dtypes raise the MXU roofline
    big_part = vmem_cap >= (100 << 20)             # 128 MiB v5e/v6e vs 64 MiB v7x
    base_budget = (24 << 20) if big_part else (6 << 20)
    p_cap = min(4 << 20, base_budget)

    # Arithmetic intensity of the flat one-matmul path, f32-equiv flops / HBM byte.
    flat_intensity = 2.0 * hw * howo / float((hw + howo) * itemsize)
    p1_bytes = hw * howo * itemsize

    if _force_path is not None:
        path = _force_path
    else:
        # Flat only while it stays HBM-bound on this generation AND P stays small.
        path = "flat" if (p1_bytes <= p_cap and flat_intensity <= xover) else "factorized"

    if path == "flat":
        # Pack g images per row so the output block is lane-dense (>=128 lanes)
        # when Ho*Wo is small; the g^2-sized block-diagonal P and the g-times
        # extra zero-FLOPs must stay under the P cap / roofline crossover.
        g = 1
        if howo < 128 and nc > 1:
            for d in range(2, nc + 1):
                if nc % d:
                    continue
                if (d * flat_intensity > xover or
                        (d * hw) * (d * howo) * itemsize > p_cap):
                    break
                g = d
                if d * howo >= 128:
                    break
        rows = nc // g
        # P[r*W + c, oh*Wo + ow] = 1 iff pixel (r, c) lies in output window (oh, ow);
        # block-diagonal over the g packed images (no cross-image mixing).
        p_single = (a_ind.T[:, None, :, None] & b_ind[None, :, None, :]) \
            .reshape(hw, howo).astype(np.float32)
        p_np = np.kron(np.eye(g, dtype=np.float32), p_single)      # (g*HW, g*HoWo)
        p_mat = jnp.asarray(p_np, dtype=x.dtype)                    # baked constant
        # TODO(synk): single-buffer the resident P block (pipeline_mode=pl.Buffered(1));
        # its double-buffered footprint is accounted for in the budget instead.
        const_bytes = 2 * p_np.size * itemsize
        row_bytes = 2 * g * (hw + howo) * itemsize                  # 2x-buffered in+out
        budget = max(1 << 20, base_budget - const_bytes)
        tb = _choose_block_rows(rows, row_bytes, budget, align)
        needed = tb * row_bytes + const_bytes
        out_flat = pl.pallas_call(
            functools.partial(_avgpool_flat_kernel, scale=scale),
            out_shape=jax.ShapeDtypeStruct((rows, g * howo), x.dtype),
            grid_spec=pltpu.PrefetchScalarGridSpec(
                num_scalar_prefetch=0,
                grid=(pl.cdiv(rows, tb),),
                in_specs=[
                    pl.BlockSpec((tb, g * hw), lambda i: (i, 0)),       # packed rows
                    pl.BlockSpec((g * hw, g * howo), lambda i: (0, 0)),  # P (resident)
                ],
                out_specs=pl.BlockSpec((tb, g * howo), lambda i: (i, 0)),
            ),
            compiler_params=_mosaic_params(needed, vmem_cap),
        )(x.reshape(rows, g * hw), p_mat)
        # Ragged last block: padded input rows only feed their own (discarded)
        # output rows — the block-diagonal P never mixes rows, so padded
        # garbage cannot leak into valid outputs.
        return out_flat.reshape(n, c, ho, wo)

    # Factorized path for larger spatial dims: out = A @ x @ B, both steps as
    # flat 2-D matmuls inside the kernel (W and Wo / H and Ho stay lane-dense).
    at_mat = jnp.asarray(a_ind.T, dtype=jnp.float32)                # (H, Ho)
    b_mat = jnp.asarray(b_ind, dtype=x.dtype)                       # (W, Wo)
    const_bytes = 2 * (h * ho * 4 + w * wo * itemsize)              # resident A^T, B (2x buf)
    row_bytes = (2 * (hw + howo) * itemsize                         # in/out, 2x-buffered
                 + 4 * 2 * (h * wo + howo))                         # f32 temporaries
    budget = max(1 << 20, base_budget - const_bytes)
    tb = _choose_block_rows(nc, row_bytes, budget, align)
    needed = tb * row_bytes + const_bytes
    out3 = pl.pallas_call(
        functools.partial(_avgpool_factored_kernel, scale=scale),
        out_shape=jax.ShapeDtypeStruct((nc, ho, wo), x.dtype),
        grid_spec=pltpu.PrefetchScalarGridSpec(
            num_scalar_prefetch=0,
            grid=(pl.cdiv(nc, tb),),
            in_specs=[
                pl.BlockSpec((tb, h, w), lambda i: (i, 0, 0)),          # image slab
                pl.BlockSpec((h, ho), lambda i: (0, 0)),                # A^T (resident)
                pl.BlockSpec((w, wo), lambda i: (0, 0)),                # B (resident)
            ],
            out_specs=pl.BlockSpec((tb, ho, wo), lambda i: (i, 0, 0)),
        ),
        compiler_params=_mosaic_params(needed, vmem_cap),
    )(x.reshape(nc, h, w), at_mat, b_mat)
    return out3.reshape(n, c, ho, wo)


# ---------------------------------------------------------------------------
# Reference + test
# ---------------------------------------------------------------------------


def _reference_avg_pool(x, pool_size, stride):
    """Plain-JAX reference matching nn.AvgPool2d defaults."""
    n, c, h, w = x.shape
    ho = (h - pool_size) // stride + 1
    wo = (w - pool_size) // stride + 1
    acc = jnp.zeros((n, c, ho, wo), jnp.float32)
    for i in range(pool_size):
        for j in range(pool_size):
            acc = acc + jax.lax.slice(
                x,
                (0, 0, i, j),
                (n, c, i + (ho - 1) * stride + 1, j + (wo - 1) * stride + 1),
                (1, 1, stride, stride),
            )
    return (acc / (pool_size * pool_size)).astype(x.dtype)


if __name__ == "__main__":
    key = jax.random.PRNGKey(0)

    # Module config: AvgPool(pool_size=2, stride=2) on (2, 4, 16, 16).
    x = jax.random.normal(key, (2, 4, 16, 16), dtype=jnp.float32)
    out = jax.block_until_ready(avg_pool(x, 2, 2))
    ref = _reference_avg_pool(x, 2, 2)
    assert out.shape == ref.shape == (2, 4, 8, 8), out.shape
    assert jnp.allclose(out, ref, atol=1e-4, rtol=1e-4), "mismatch (pool2/stride2)"

    # Overlapping windows (pool 3, stride 2) on the flat-matmul path.
    out2 = jax.block_until_ready(avg_pool(x, 3, 2))
    ref2 = _reference_avg_pool(x, 3, 2)
    assert out2.shape == ref2.shape == (2, 4, 7, 7), out2.shape
    assert jnp.allclose(out2, ref2, atol=1e-4, rtol=1e-4), "mismatch (pool3/stride2)"

    # Exercise the factorized large-spatial path on a modest shape.
    x3 = jax.random.normal(jax.random.PRNGKey(0), (1, 2, 64, 64), dtype=jnp.float32)
    out3 = jax.block_until_ready(avg_pool(x3, 2, 2, _force_path="factorized"))
    ref3 = _reference_avg_pool(x3, 2, 2)
    assert out3.shape == ref3.shape == (1, 2, 32, 32), out3.shape
    assert jnp.allclose(out3, ref3, atol=1e-4, rtol=1e-4), "mismatch (factorized)"

    print("KERNEL_OK")
</pallas_src>

<mosaic_0001>
module attributes {stable_mosaic.version = 11 : i64} {
  func.func @_avgpool_flat_kernel(%arg0: i32, %arg1: memref<8x256xf32, #tpu.memory_space<vmem>>, %arg2: memref<256x64xf32, #tpu.memory_space<vmem>>, %arg3: memref<8x64xf32, #tpu.memory_space<vmem>>) attributes {dimension_semantics = [#tpu.dimension_semantics<parallel>], iteration_bounds = array<i64: 1>, scalar_prefetch = 0 : i64, scratch_operands = 0 : i64, tpu.core_type = #tpu.core_type<tc>, window_params = [{transform_indices = @transform_0, window_bounds = array<i64: 8, 256>}, {pipeline_mode = #tpu.pipeline_mode<synchronous>, transform_indices = @transform_1, window_bounds = array<i64: 256, 64>}, {transform_indices = @transform_2, window_bounds = array<i64: 8, 64>}]} {
    %c0 = arith.constant 0 : index
    %c0_0 = arith.constant 0 : index
    %0 = vector.load %arg1[%c0, %c0_0] : memref<8x256xf32, #tpu.memory_space<vmem>>, vector<8x256xf32>
    %c0_1 = arith.constant 0 : index
    %c0_2 = arith.constant 0 : index
    %1 = vector.load %arg2[%c0_1, %c0_2] : memref<256x64xf32, #tpu.memory_space<vmem>>, vector<256x64xf32>
    %cst = arith.constant dense<0.000000e+00> : vector<8x64xf32>
    %2 = tpu.matmul %0, %1, %cst {dimension_numbers = #tpu.dot_dimension_numbers<[1], [0], [0], [1], [0, 0, 1, 1], [], []>} : vector<8x256xf32>, vector<256x64xf32>, vector<8x64xf32> -> vector<8x64xf32>
    %cst_3 = arith.constant 2.500000e-01 : f32
    %3 = vector.broadcast %cst_3 : f32 to vector<8x64xf32>
    %4 = arith.mulf %2, %3 : vector<8x64xf32>
    %c0_4 = arith.constant 0 : index
    %c0_5 = arith.constant 0 : index
    %5 = vector.load %arg3[%c0_4, %c0_5] : memref<8x64xf32, #tpu.memory_space<vmem>>, vector<8x64xf32>
    tpu.vector_store %arg3[%c0_4, %c0_5], %4 {strides = array<i32>} : memref<8x64xf32, #tpu.memory_space<vmem>>, vector<8x64xf32>,
    return
  }
  func.func @transform_0(%arg0: i32) -> (i32, i32) {
    %c0_i32 = arith.constant 0 : i32
    %c0_i32_0 = arith.constant 0 : i32
    return %arg0, %c0_i32 : i32, i32
  }
  func.func @transform_1(%arg0: i32) -> (i32, i32) {
    %c0_i32 = arith.constant 0 : i32
    %c0_i32_0 = arith.constant 0 : i32
    %c0_i32_1 = arith.constant 0 : i32
    return %c0_i32, %c0_i32_0 : i32, i32
  }
  func.func @transform_2(%arg0: i32) -> (i32, i32) {
    %c0_i32 = arith.constant 0 : i32
    %c0_i32_0 = arith.constant 0 : i32
    return %arg0, %c0_i32 : i32, i32
  }
}

</mosaic_0001>

<llo_original>
// kernel: avg_pool.1
$region0: #{avg_pool.1}
  #allocation0 [shape = 'u32[]', space=smem, size = 0x4, offset = 0x4, fixed_abs, tag = 'smem constant byte address 0x4 - core index']
  #allocation1 [shape = 'u32[144,128]{1,0:T(1,128)}', space=vmem, size = 0x12000, scoped, tag = 'internal scratch']
  %s0 = inlined_call_operand.vmem [shape: f32[8,256], index: 0, kind: input, shape index: {}]
  %s1 = inlined_call_operand.hbm [shape: f32[256,64], index: 1, kind: input, shape index: {}]
  %s2 = inlined_call_operand.vmem [shape: f32[8,64], index: 2, kind: output, shape index: {}]
  %s3 = sld [smem:[#allocation0]]
  $region22: #{avg_pool.1} parent=0
    _
  %s5 = ssub.s32 1, %s3
  %s6 = scalar_select 0, %s5, %s3
  $region1: #{avg_pool.1} parent=0
    #allocation2 [shape = 'u8[131072]{0}', space=vmem, size = 0x20000, scoped, tag = 'input window, operand 1, single buffered']
    #allocation3 [shape = 's32[1]{0}', space=sflag, size = 0x4, scoped, tag = 'scoped memory for avg_pool.1']
    %7 = vsyncpa [#allocation3], 0
    // Predicated region
    $region2: #{avg_pool.1} parent=1 // pred_check
      _
    $region3: #{avg_pool.1} parent=1 // pred_check_branch
      %9 = sbr.rel (0) target = $region5
    $region4: #{avg_pool.1} parent=1 // pred_region
      _
    $region5: #{avg_pool.1} parent=1 // pred_fallthru
      _
    // Predicated region
    $region6: #{avg_pool.1} parent=1 // pred_check
      _
    $region7: #{avg_pool.1} parent=1 // pred_check_branch
      %11 = sbr.rel (0) target = $region9
    $region8: #{avg_pool.1} parent=1 // pred_region
      %s13 = ssub.s32 4096, 4096
      %14 = vsyncadd [#allocation3], %s13
      %s15 = sshll.u32 [#allocation2], 4
      %s16 = int_to_ptr.vmem [resolvable:$true] %s15
      %21 = dma.hbm_to_vmem [thread:$0]  %s1, 4096, %s16, [#allocation3], 128, 128, 8
    $region9: #{avg_pool.1} parent=1 // pred_fallthru
      _
    // Predicated region
    $region10: #{avg_pool.1} parent=1 // pred_check
      _
    $region11: #{avg_pool.1} parent=1 // pred_check_branch
      %23 = sbr.rel (0) target = $region13
    $region12: #{avg_pool.1} parent=1 // pred_region
      %24 = dma.done [#allocation3], 4096
    $region13: #{avg_pool.1} parent=1 // pred_fallthru
      _
    %v25 = vld [vmem:[%s0] sm:$0xff]
    %v26 = vld [vmem:[%s0 + $0x8] sm:$0xff]
    %v27 = vld [vmem:[#allocation2] sm:$0xff]
    %v28 = vld [vmem:[#allocation2 + $0x8] sm:$0xff]
    %v29 = vld [vmem:[#allocation2 + $0x10] sm:$0xff]
    %v30 = vld [vmem:[#allocation2 + $0x18] sm:$0xff]
    %v31 = vld [vmem:[#allocation2 + $0x20] sm:$0xff]
    %v32 = vld [vmem:[#allocation2 + $0x28] sm:$0xff]
    %v33 = vld [vmem:[#allocation2 + $0x30] sm:$0xff]
    %v34 = vld [vmem:[#allocation2 + $0x38] sm:$0xff]
    %v35 = vld [vmem:[#allocation2 + $0x40] sm:$0xff]
    %v36 = vld [vmem:[#allocation2 + $0x48] sm:$0xff]
    %v37 = vld [vmem:[#allocation2 + $0x50] sm:$0xff]
    %v38 = vld [vmem:[#allocation2 + $0x58] sm:$0xff]
    %v39 = vld [vmem:[#allocation2 + $0x60] sm:$0xff]
    %v40 = vld [vmem:[#allocation2 + $0x68] sm:$0xff]
    %v41 = vld [vmem:[#allocation2 + $0x70] sm:$0xff]
    %v42 = vld [vmem:[#allocation2 + $0x78] sm:$0xff]
    %v43 = vld [vmem:[#allocation2 + $0x80] sm:$0xff]
    %v44 = vld [vmem:[#allocation2 + $0x88] sm:$0xff]
    %v45 = vld [vmem:[#allocation2 + $0x90] sm:$0xff]
    %v46 = vld [vmem:[#allocation2 + $0x98] sm:$0xff]
    %v47 = vld [vmem:[#allocation2 + $0xa0] sm:$0xff]
    %v48 = vld [vmem:[#allocation2 + $0xa8] sm:$0xff]
    %v49 = vld [vmem:[#allocation2 + $0xb0] sm:$0xff]
    %v50 = vld [vmem:[#allocation2 + $0xb8] sm:$0xff]
    %v51 = vld [vmem:[#allocation2 + $0xc0] sm:$0xff]
    %v52 = vld [vmem:[#allocation2 + $0xc8] sm:$0xff]
    %v53 = vld [vmem:[#allocation2 + $0xd0] sm:$0xff]
    %v54 = vld [vmem:[#allocation2 + $0xd8] sm:$0xff]
    %v55 = vld [vmem:[#allocation2 + $0xe0] sm:$0xff]
    %v56 = vld [vmem:[#allocation2 + $0xe8] sm:$0xff]
    %v57 = vld [vmem:[#allocation2 + $0xf0] sm:$0xff]
    %v58 = vld [vmem:[#allocation2 + $0xf8] sm:$0xff]
    %59 = vmatprep.subr.mxu0 0.0
    %60 = vmatpush1.msra.mxu0 %v27
    %61 = vmatprep.subr.mxu0 0.0
    %62 = vmatpush1.msra.mxu0 %v28
    %63 = vmatprep.subr.mxu0 0.0
    %64 = vmatpush1.msra.mxu0 %v29
    %65 = vmatprep.subr.mxu0 0.0
    %66 = vmatpush1.msra.mxu0 %v30
    %67 = vmatprep.subr.mxu0 0.0
    %68 = vmatpush1.msra.mxu0 %v31
    %69 = vmatprep.subr.mxu0 0.0
    %70 = vmatpush1.msra.mxu0 %v32
    %71 = vmatprep.subr.mxu0 0.0
    %72 = vmatpush1.msra.mxu0 %v33
    %73 = vmatprep.subr.mxu0 0.0
    %74 = vmatpush1.msra.mxu0 %v34
    %75 = vmatprep.subr.mxu0 0.0
    %76 = vmatpush1.msra.mxu0 %v35
    %77 = vmatprep.subr.mxu0 0.0
    %78 = vmatpush1.msra.mxu0 %v36
    %79 = vmatprep.subr.mxu0 0.0
    %80 = vmatpush1.msra.mxu0 %v37
    %81 = vmatprep.subr.mxu0 0.0
    %82 = vmatpush1.msra.mxu0 %v38
    %83 = vmatprep.subr.mxu0 0.0
    %84 = vmatpush1.msra.mxu0 %v39
    %85 = vmatprep.subr.mxu0 0.0
    %86 = vmatpush1.msra.mxu0 %v40
    %87 = vmatprep.subr.mxu0 0.0
    %88 = vmatpush1.msra.mxu0 %v41
    %89 = vmatprep.subr.mxu0 0.0
    %90 = vmatpush1.msra.mxu0 %v42
    %91 = vmatprep.subr.mxu0 0.0
    %92 = vmatpush1.msra.mxu0 %v43
    %93 = vmatprep.subr.mxu0 0.0
    %94 = vmatpush1.msra.mxu0 %v44
    %95 = vmatprep.subr.mxu0 0.0
    %96 = vmatpush1.msra.mxu0 %v45
    %97 = vmatprep.subr.mxu0 0.0
    %98 = vmatpush1.msra.mxu0 %v46
    %99 = vmatprep.subr.mxu0 0.0
    %100 = vmatpush1.msra.mxu0 %v47
    %101 = vmatprep.subr.mxu0 0.0
    %102 = vmatpush1.msra.mxu0 %v48
    %103 = vmatprep.subr.mxu0 0.0
    %104 = vmatpush1.msra.mxu0 %v49
    %105 = vmatprep.subr.mxu0 0.0
    %106 = vmatpush1.msra.mxu0 %v50
    %107 = vmatprep.subr.mxu0 0.0
    %108 = vmatpush1.msra.mxu0 %v51
    %109 = vmatprep.subr.mxu0 0.0
    %110 = vmatpush1.msra.mxu0 %v52
    %111 = vmatprep.subr.mxu0 0.0
    %112 = vmatpush1.msra.mxu0 %v53
    %113 = vmatprep.subr.mxu0 0.0
    %114 = vmatpush1.msra.mxu0 %v54
    %115 = vmatprep.subr.mxu0 0.0
    %116 = vmatpush1.msra.mxu0 %v55
    %117 = vmatprep.subr.mxu0 0.0
    %118 = vmatpush1.msra.mxu0 %v56
    %119 = vmatprep.subr.mxu0 0.0
    %120 = vmatpush1.msra.mxu0 %v57
    %121 = vmatprep.subr.mxu0 0.0
    %122 = vmatpush1.msra.mxu0 %v58
    %123 = vmatprep.mubr.f32.mxu0 %v26
    %124 = vmatmul.mubr.f32.gmra.mrb[0].mxu0 %v25
    %v125 = vpop.f32.mrb[0].mxu0
    %v126 = vadd.f32 0.0, %v125
    %v127 = vpop.f32.mrb[0].mxu0
    %128 = vdwg.mxu0
    %v129 = vmul.f32 %v126, 0.25
    %vm130 = vcmask 523264
    %131 = vst.msk [vmem:[%s2] sm:$0xff] %vm130, %v129
    // Predicated region
    $region14: #{avg_pool.1} parent=1 // pred_check
      _
    $region15: #{avg_pool.1} parent=1 // pred_check_branch
      %133 = sbr.rel (0) target = $region17
    $region16: #{avg_pool.1} parent=1 // pred_region
      _
    $region17: #{avg_pool.1} parent=1 // pred_fallthru
      _
    // Predicated region
    $region18: #{avg_pool.1} parent=1 // pred_check
      _
    $region19: #{avg_pool.1} parent=1 // pred_check_branch
      %135 = sbr.rel (0) target = $region21
    $region20: #{avg_pool.1} parent=1 // pred_region
      _
    $region21: #{avg_pool.1} parent=1 // pred_fallthru
      _
    %136 = vsyncpa [#allocation3], 1

</llo_original>
